<compile_context>
chip_gen: v7x
topology: tpu7x:2x2x1
jax: 0.10.0
libtpu: 0.0.40
codegen_flags: <defaults>
</compile_context>

<pallas_src>
import functools

import jax
import jax.numpy as jnp
import numpy as np
from jax.experimental import pallas as pl
from jax.experimental.pallas import tpu as pltpu


def _round_up(x, m):
    return ((x + m - 1) // m) * m


def _cdiv(a, b):
    return -(-a // b)


@functools.lru_cache(maxsize=1)
def _vmem_capacity_bytes():
    try:
        return int(pltpu.get_tpu_info().vmem_capacity_bytes)
    except Exception:
        return 64 << 20   # conservative default (v7x per-TC VMEM)


# ----------------------------------------------------------------------------
# Fast path: the whole conv output y fits VMEM -> x is read from HBM only once.
# ----------------------------------------------------------------------------
def _downsample_kernel_cached(xT_ref, wT_ref, gamma_ref, beta_ref, oT_ref,
                              sum_ref, sq_ref, ycache_ref, *, m_true, eps):
    p = pl.program_id(0)           # 0 = stats pass, 1 = normalize/write pass
    i = pl.program_id(1)           # M-tile index
    n_m = pl.num_programs(1)

    @pl.when(p == 0)
    def _stats_pass():
        @pl.when(i == 0)
        def _():
            sum_ref[...] = jnp.zeros_like(sum_ref)
            sq_ref[...] = jnp.zeros_like(sq_ref)

        y = jnp.dot(wT_ref[...], xT_ref[...],
                    preferred_element_type=jnp.float32)
        ycache_ref[i] = y
        # lane-axis reductions (XLU slot); zero-padded columns contribute 0.
        sum_ref[...] += jnp.sum(y, axis=-1, keepdims=True)
        sq_ref[...] += jnp.sum(y * y, axis=-1, keepdims=True)

        @pl.when(i == n_m - 1)
        def _finalize():
            inv_m = 1.0 / float(m_true)
            mean = sum_ref[...] * inv_m
            # biased variance (training-mode BN); clamp guards against tiny
            # negative values from the E[y^2]-E[y]^2 cancellation.
            var = jnp.maximum(sq_ref[...] * inv_m - mean * mean, 0.0)
            inv_std = jax.lax.rsqrt(var + eps)
            scale = gamma_ref[...] * inv_std
            shift = beta_ref[...] - mean * scale
            sum_ref[...] = scale     # scratch now carries `scale` for phase 1
            sq_ref[...] = shift      # scratch now carries `shift` for phase 1

    @pl.when(p == 1)
    def _write_pass():
        oT_ref[...] = ycache_ref[i] * sum_ref[...] + sq_ref[...]


# ----------------------------------------------------------------------------
# Streaming path: x is read twice; scale is folded into the weights so phase 1
# is a single matmul + shift.
# ----------------------------------------------------------------------------
def _downsample_kernel_stream(xT_ref, wT_ref, gamma_ref, beta_ref, oT_ref,
                              sum_ref, sq_ref, ws_ref, shift_ref, *,
                              m_true, eps):
    p = pl.program_id(0)
    i = pl.program_id(1)
    n_m = pl.num_programs(1)

    @pl.when(p == 0)
    def _stats_pass():
        @pl.when(i == 0)
        def _():
            sum_ref[...] = jnp.zeros_like(sum_ref)
            sq_ref[...] = jnp.zeros_like(sq_ref)

        y = jnp.dot(wT_ref[...], xT_ref[...],
                    preferred_element_type=jnp.float32)
        sum_ref[...] += jnp.sum(y, axis=-1, keepdims=True)
        sq_ref[...] += jnp.sum(y * y, axis=-1, keepdims=True)

        @pl.when(i == n_m - 1)
        def _finalize():
            inv_m = 1.0 / float(m_true)
            mean = sum_ref[...] * inv_m
            var = jnp.maximum(sq_ref[...] * inv_m - mean * mean, 0.0)
            inv_std = jax.lax.rsqrt(var + eps)
            scale = gamma_ref[...] * inv_std
            # fold scale into the weights for phase 1 (removes the per-tile
            # (Cout,1)->(Cout,tm) broadcast multiply from the hot path).
            ws_ref[...] = (scale * wT_ref[...].astype(jnp.float32)
                           ).astype(ws_ref.dtype)
            shift_ref[...] = beta_ref[...] - mean * scale

    @pl.when(p == 1)
    def _write_pass():
        oT_ref[...] = (jnp.dot(ws_ref[...], xT_ref[...],
                               preferred_element_type=jnp.float32)
                       + shift_ref[...])


# ----------------------------------------------------------------------------
# Module wrapper
# ----------------------------------------------------------------------------
@functools.partial(jax.jit,
                   static_argnames=("eps", "compute_dtype", "cache_y", "tm"))
def downsample_d(x, conv_w, gamma, beta, *, eps=1e-5,
                 compute_dtype=jnp.float32, cache_y=None, tm=None):
    """x: (N, Cin, H, W), conv_w: (Cout, Cin, 2, 2), gamma/beta: (Cout,)."""
    N, Cin, H, W = x.shape
    Cout = conv_w.shape[0]
    OH, OW = H // 2, W // 2
    M = N * OH * OW
    K = Cin * 4

    itemsize = np.dtype(compute_dtype).itemsize
    cout_pad = _round_up(Cout, 8)

    vmem_cap = _vmem_capacity_bytes()
    budget = int(vmem_cap * 0.6)          # ~38 MiB on v7x, ~77 MiB on v5e/v6e

    # ---- adaptive lane tile: aim for a ~3 MiB xT tile, clamp to [512, 8192],
    # then shrink so the double-buffered working set stays inside the budget.
    fixed_bytes = (2 * cout_pad * _round_up(K, 128) * itemsize   # wT buffers
                   + 8 * cout_pad * 128 * 4                      # params + stats
                   + (2 << 20))                                  # headroom
    if tm is None:
        tm = _round_up(max(1, (3 << 20) // max(K * itemsize, 1)), 128)
        tm = int(min(max(tm, 512), 8192))
    per_lane_bytes = 2 * K * itemsize + 2 * cout_pad * 4
    tm_fit = max(128, ((budget - fixed_bytes) // per_lane_bytes) // 128 * 128)
    tm = max(128, int(min(tm, tm_fit)))

    # minimize zero-padding: split M evenly across cdiv(M, tm) tiles.
    n_m = max(1, _cdiv(M, tm))
    tm_eff = _round_up(_cdiv(M, n_m), 128)
    n_m = _cdiv(M, tm_eff)
    M_pad = n_m * tm_eff

    # ---- fast path gate: cache the whole conv output y in VMEM so phase 1
    # skips both the xT re-read and the matmul.
    y_cache_bytes = n_m * cout_pad * tm_eff * 4
    step_bytes = (2 * K * tm_eff * itemsize + 2 * cout_pad * tm_eff * 4
                  + fixed_bytes)
    use_cache = (bool(cache_y) if cache_y is not None
                 else (y_cache_bytes + step_bytes) <= budget)

    # deeper x pipelining when it pays for itself and fits.
    n_buf_x = 2
    if n_m >= 3:
        tri = (3 * K * tm_eff * itemsize + 2 * cout_pad * tm_eff * 4
               + fixed_bytes + (y_cache_bytes if use_cache else 0))
        if tri <= budget:
            n_buf_x = 3

    # ---- glue: stride-2 2x2 patch extraction directly into the transposed
    # (K, M) layout; K ordered (cin, kh, kw) to match conv_w.reshape(Cout, K).
    xT = (x.reshape(N, Cin, OH, 2, OW, 2)
           .transpose(1, 3, 5, 0, 2, 4)
           .reshape(K, M)
           .astype(compute_dtype))
    if M_pad != M:
        xT = jnp.pad(xT, ((0, 0), (0, M_pad - M)))
    wT = conv_w.reshape(Cout, K).astype(compute_dtype)           # (Cout, K)
    gamma2 = gamma.reshape(Cout, 1).astype(jnp.float32)
    beta2 = beta.reshape(Cout, 1).astype(jnp.float32)

    # xT index map: streaming path re-reads tile i in phase 1; cached path pins
    # phase 1 to tile 0 so no new xT DMAs are issued after phase 0.
    if use_cache:
        x_index = lambda p, i: (0, i * (1 - p))
    else:
        x_index = lambda p, i: (0, i)
    x_spec_kwargs = {}
    if n_buf_x == 3:
        x_spec_kwargs["pipeline_mode"] = pl.Buffered(3)
    x_spec = pl.BlockSpec((K, tm_eff), x_index, **x_spec_kwargs)

    if use_cache:
        kernel = functools.partial(_downsample_kernel_cached,
                                   m_true=M, eps=float(eps))
        scratch = [pltpu.VMEM((Cout, 1), jnp.float32),            # sum -> scale
                   pltpu.VMEM((Cout, 1), jnp.float32),            # sq  -> shift
                   pltpu.VMEM((n_m, Cout, tm_eff), jnp.float32)]  # y cache
    else:
        kernel = functools.partial(_downsample_kernel_stream,
                                   m_true=M, eps=float(eps))
        scratch = [pltpu.VMEM((Cout, 1), jnp.float32),            # sum
                   pltpu.VMEM((Cout, 1), jnp.float32),            # sumsq
                   pltpu.VMEM((Cout, K), compute_dtype),          # scaled weights
                   pltpu.VMEM((Cout, 1), jnp.float32)]            # shift

    footprint = (n_buf_x * K * tm_eff * itemsize
                 + 2 * cout_pad * tm_eff * 4
                 + fixed_bytes
                 + (y_cache_bytes if use_cache else 0))
    vmem_limit = int(min(max(int(footprint * 1.5) + (2 << 20), 16 << 20),
                         int(vmem_cap * 0.9)))

    # NOTE on out_specs: phase 0 never writes the output. Its block index is
    # pinned to block 0 and phase 1's first iteration (which DOES write) maps
    # to the same block, so under current revisit semantics no unwritten block
    # is ever flushed to HBM.  Verified by the numerics check in __main__.
    oT = pl.pallas_call(
        kernel,
        out_shape=jax.ShapeDtypeStruct((Cout, M_pad), jnp.float32),
        grid_spec=pltpu.PrefetchScalarGridSpec(
            num_scalar_prefetch=0,
            grid=(2, n_m),                                        # (phase, tile)
            in_specs=[
                x_spec,                                           # xT tile
                pl.BlockSpec((Cout, K), lambda p, i: (0, 0)),     # wT (resident)
                pl.BlockSpec((Cout, 1), lambda p, i: (0, 0)),     # gamma
                pl.BlockSpec((Cout, 1), lambda p, i: (0, 0)),     # beta
            ],
            out_specs=pl.BlockSpec((Cout, tm_eff), lambda p, i: (0, i * p)),
            scratch_shapes=scratch,
        ),
        compiler_params=pltpu.CompilerParams(
            # Phase ordering and the stats accumulation are order-dependent.
            dimension_semantics=("arbitrary", "arbitrary"),
            vmem_limit_bytes=vmem_limit,
        ),
    )(xT, wT, gamma2, beta2)

    # (Cout, M) -> NCHW.  TODO(synk): emit (Cout, N, OH, OW) directly when the
    # consumer tolerates that layout, to avoid this final transpose.
    return oT[:, :M].reshape(Cout, N, OH, OW).transpose(1, 0, 2, 3)


# ----------------------------------------------------------------------------
# Pure-JAX reference (for verification)
# ----------------------------------------------------------------------------
def downsample_d_ref(x, conv_w, gamma, beta, eps=1e-5):
    y = jax.lax.conv_general_dilated(
        x, conv_w, window_strides=(2, 2), padding="VALID",
        dimension_numbers=("NCHW", "OIHW", "NCHW"),
        precision=jax.lax.Precision.HIGHEST,
    )
    mean = jnp.mean(y, axis=(0, 2, 3), keepdims=True)
    var = jnp.mean((y - mean) ** 2, axis=(0, 2, 3), keepdims=True)
    y_hat = (y - mean) * jax.lax.rsqrt(var + eps)
    return y_hat * gamma[None, :, None, None] + beta[None, :, None, None]


if __name__ == "__main__":
    key = jax.random.PRNGKey(0)
    k_x, k_w, k_g, k_b = jax.random.split(key, 4)

    N, Cin, H, W = 2, 4, 16, 16
    Cout = 8

    x = jax.random.normal(k_x, (N, Cin, H, W), dtype=jnp.float32)
    # Conv2d(nIn, nOut, k=2, s=2, bias=False) weight: (Cout, Cin, 2, 2)
    conv_w = jax.random.normal(k_w, (Cout, Cin, 2, 2), dtype=jnp.float32) * 0.25
    # BatchNorm2d(nOut) affine params (deterministic, non-trivial)
    gamma = 1.0 + 0.1 * jax.random.normal(k_g, (Cout,), dtype=jnp.float32)
    beta = 0.1 * jax.random.normal(k_b, (Cout,), dtype=jnp.float32)

    ref = downsample_d_ref(x, conv_w, gamma, beta)

    # default path (auto-selects the VMEM y-cache fast path at this shape)
    out = jax.block_until_ready(downsample_d(x, conv_w, gamma, beta))
    assert out.shape == (N, Cout, H // 2, W // 2)
    np.testing.assert_allclose(np.asarray(out), np.asarray(ref),
                               rtol=1e-2, atol=1e-2)

    # streaming path (scale folded into weights, x read twice) — forced
    out_stream = jax.block_until_ready(
        downsample_d(x, conv_w, gamma, beta, cache_y=False))
    np.testing.assert_allclose(np.asarray(out_stream), np.asarray(ref),
                               rtol=1e-2, atol=1e-2)

    # bfloat16-input path (halves the dominant HBM read; BN math stays f32)
    out_bf16 = jax.block_until_ready(
        downsample_d(x, conv_w, gamma, beta, compute_dtype=jnp.bfloat16))
    np.testing.assert_allclose(np.asarray(out_bf16), np.asarray(ref),
                               rtol=3e-2, atol=3e-2)

    print("KERNEL_OK")
</pallas_src>

<mosaic_0001>
module attributes {stable_mosaic.version = 11 : i64} {
  func.func @_downsample_kernel_cached(%arg0: i32, %arg1: i32, %arg2: memref<16x128xf32, #tpu.memory_space<vmem>>, %arg3: memref<8x16xf32, #tpu.memory_space<vmem>>, %arg4: memref<8x1xf32, #tpu.memory_space<vmem>>, %arg5: memref<8x1xf32, #tpu.memory_space<vmem>>, %arg6: memref<8x128xf32, #tpu.memory_space<vmem>>, %arg7: memref<8x1xf32, #tpu.memory_space<vmem>>, %arg8: memref<8x1xf32, #tpu.memory_space<vmem>>, %arg9: memref<1x8x128xf32, #tpu.memory_space<vmem>>) attributes {dimension_semantics = [#tpu.dimension_semantics<arbitrary>, #tpu.dimension_semantics<arbitrary>], iteration_bounds = array<i64: 2, 1>, scalar_prefetch = 0 : i64, scratch_operands = 3 : i64, tpu.core_type = #tpu.core_type<tc>, window_params = [{transform_indices = @transform_0, window_bounds = array<i64: 16, 128>}, {pipeline_mode = #tpu.pipeline_mode<synchronous>, transform_indices = @transform_1, window_bounds = array<i64: 8, 16>}, {pipeline_mode = #tpu.pipeline_mode<synchronous>, transform_indices = @transform_2, window_bounds = array<i64: 8, 1>}, {pipeline_mode = #tpu.pipeline_mode<synchronous>, transform_indices = @transform_3, window_bounds = array<i64: 8, 1>}, {transform_indices = @transform_4, window_bounds = array<i64: 8, 128>}]} {
    %c0_i32 = arith.constant 0 : i32
    %0 = arith.cmpi eq, %arg0, %c0_i32 : i32
    %1 = arith.extui %0 : i1 to i32
    %c0_i32_0 = arith.constant 0 : i32
    %2 = arith.cmpi ne, %1, %c0_i32_0 : i32
    scf.if %2 {
      %c0_i32_2 = arith.constant 0 : i32
      %6 = arith.cmpi eq, %arg1, %c0_i32_2 : i32
      %7 = arith.extui %6 : i1 to i32
      %c0_i32_3 = arith.constant 0 : i32
      %8 = arith.cmpi ne, %7, %c0_i32_3 : i32
      scf.if %8 {
        %cst_21 = arith.constant 0.000000e+00 : f32
        %30 = vector.broadcast %cst_21 : f32 to vector<8x1xf32>
        %c0_22 = arith.constant 0 : index
        %c0_23 = arith.constant 0 : index
        %31 = vector.load %arg7[%c0_22, %c0_23] : memref<8x1xf32, #tpu.memory_space<vmem>>, vector<8x1xf32>
        tpu.vector_store %arg7[%c0_22, %c0_23], %30 {strides = array<i32>} : memref<8x1xf32, #tpu.memory_space<vmem>>, vector<8x1xf32>,
        %cst_24 = arith.constant 0.000000e+00 : f32
        %32 = vector.broadcast %cst_24 : f32 to vector<8x1xf32>
        %c0_25 = arith.constant 0 : index
        %c0_26 = arith.constant 0 : index
        %33 = vector.load %arg8[%c0_25, %c0_26] : memref<8x1xf32, #tpu.memory_space<vmem>>, vector<8x1xf32>
        tpu.vector_store %arg8[%c0_25, %c0_26], %32 {strides = array<i32>} : memref<8x1xf32, #tpu.memory_space<vmem>>, vector<8x1xf32>,
      } else {
      }
      %c0 = arith.constant 0 : index
      %c0_4 = arith.constant 0 : index
      %9 = vector.load %arg3[%c0, %c0_4] : memref<8x16xf32, #tpu.memory_space<vmem>>, vector<8x16xf32>
      %c0_5 = arith.constant 0 : index
      %c0_6 = arith.constant 0 : index
      %10 = vector.load %arg2[%c0_5, %c0_6] : memref<16x128xf32, #tpu.memory_space<vmem>>, vector<16x128xf32>
      %cst = arith.constant dense<0.000000e+00> : vector<8x128xf32>
      %11 = tpu.matmul %9, %10, %cst {dimension_numbers = #tpu.dot_dimension_numbers<[1], [0], [0], [1], [0, 0, 1, 1], [], []>} : vector<8x16xf32>, vector<16x128xf32>, vector<8x128xf32> -> vector<8x128xf32>
      %12 = arith.index_cast %arg1 : i32 to index
      %c0_7 = arith.constant 0 : index
      %c0_8 = arith.constant 0 : index
      %13 = vector.load %arg9[%12, %c0_7, %c0_8] : memref<1x8x128xf32, #tpu.memory_space<vmem>>, vector<1x8x128xf32>
      %14 = vector.shape_cast %13 : vector<1x8x128xf32> to vector<8x128xf32>
      %15 = vector.shape_cast %11 : vector<8x128xf32> to vector<1x8x128xf32>
      tpu.vector_store %arg9[%12, %c0_7, %c0_8], %15 {strides = array<i32>} : memref<1x8x128xf32, #tpu.memory_space<vmem>>, vector<1x8x128xf32>,
      %c0_9 = arith.constant 0 : index
      %c0_10 = arith.constant 0 : index
      %16 = vector.load %arg7[%c0_9, %c0_10] : memref<8x1xf32, #tpu.memory_space<vmem>>, vector<8x1xf32>
      %cst_11 = arith.constant dense<0.000000e+00> : vector<8xf32>
      %17 = vector.multi_reduction <add>, %11, %cst_11 [1] : vector<8x128xf32> to vector<8xf32>
      %18 = vector.shape_cast %17 : vector<8xf32> to vector<8x1xf32>
      %19 = arith.addf %16, %18 : vector<8x1xf32>
      %c0_12 = arith.constant 0 : index
      %c0_13 = arith.constant 0 : index
      %20 = vector.load %arg7[%c0_12, %c0_13] : memref<8x1xf32, #tpu.memory_space<vmem>>, vector<8x1xf32>
      tpu.vector_store %arg7[%c0_12, %c0_13], %19 {strides = array<i32>} : memref<8x1xf32, #tpu.memory_space<vmem>>, vector<8x1xf32>,
      %c0_14 = arith.constant 0 : index
      %c0_15 = arith.constant 0 : index
      %21 = vector.load %arg8[%c0_14, %c0_15] : memref<8x1xf32, #tpu.memory_space<vmem>>, vector<8x1xf32>
      %22 = arith.mulf %11, %11 : vector<8x128xf32>
      %cst_16 = arith.constant dense<0.000000e+00> : vector<8xf32>
      %23 = vector.multi_reduction <add>, %22, %cst_16 [1] : vector<8x128xf32> to vector<8xf32>
      %24 = vector.shape_cast %23 : vector<8xf32> to vector<8x1xf32>
      %25 = arith.addf %21, %24 : vector<8x1xf32>
      %c0_17 = arith.constant 0 : index
      %c0_18 = arith.constant 0 : index
      %26 = vector.load %arg8[%c0_17, %c0_18] : memref<8x1xf32, #tpu.memory_space<vmem>>, vector<8x1xf32>
      tpu.vector_store %arg8[%c0_17, %c0_18], %25 {strides = array<i32>} : memref<8x1xf32, #tpu.memory_space<vmem>>, vector<8x1xf32>,
      %c0_i32_19 = arith.constant 0 : i32
      %27 = arith.cmpi eq, %arg1, %c0_i32_19 : i32
      %28 = arith.extui %27 : i1 to i32
      %c0_i32_20 = arith.constant 0 : i32
      %29 = arith.cmpi ne, %28, %c0_i32_20 : i32
      scf.if %29 {
        %c0_21 = arith.constant 0 : index
        %c0_22 = arith.constant 0 : index
        %30 = vector.load %arg7[%c0_21, %c0_22] : memref<8x1xf32, #tpu.memory_space<vmem>>, vector<8x1xf32>
        %cst_23 = arith.constant 7.812500e-03 : f32
        %31 = vector.broadcast %cst_23 : f32 to vector<8x1xf32>
        %32 = arith.mulf %30, %31 : vector<8x1xf32>
        %c0_24 = arith.constant 0 : index
        %c0_25 = arith.constant 0 : index
        %33 = vector.load %arg8[%c0_24, %c0_25] : memref<8x1xf32, #tpu.memory_space<vmem>>, vector<8x1xf32>
        %cst_26 = arith.constant 7.812500e-03 : f32
        %34 = vector.broadcast %cst_26 : f32 to vector<8x1xf32>
        %35 = arith.mulf %33, %34 : vector<8x1xf32>
        %36 = arith.mulf %32, %32 : vector<8x1xf32>
        %37 = arith.subf %35, %36 : vector<8x1xf32>
        %cst_27 = arith.constant 0.000000e+00 : f32
        %38 = vector.broadcast %cst_27 : f32 to vector<8x1xf32>
        %39 = arith.maximumf %37, %38 : vector<8x1xf32>
        %cst_28 = arith.constant 9.99999974E-6 : f32
        %40 = vector.broadcast %cst_28 : f32 to vector<8x1xf32>
        %41 = arith.addf %39, %40 : vector<8x1xf32>
        %42 = math.rsqrt %41 : vector<8x1xf32>
        %c0_29 = arith.constant 0 : index
        %c0_30 = arith.constant 0 : index
        %43 = vector.load %arg4[%c0_29, %c0_30] : memref<8x1xf32, #tpu.memory_space<vmem>>, vector<8x1xf32>
        %44 = arith.mulf %43, %42 : vector<8x1xf32>
        %c0_31 = arith.constant 0 : index
        %c0_32 = arith.constant 0 : index
        %45 = vector.load %arg5[%c0_31, %c0_32] : memref<8x1xf32, #tpu.memory_space<vmem>>, vector<8x1xf32>
        %46 = arith.mulf %32, %44 : vector<8x1xf32>
        %47 = arith.subf %45, %46 : vector<8x1xf32>
        %c0_33 = arith.constant 0 : index
        %c0_34 = arith.constant 0 : index
        %48 = vector.load %arg7[%c0_33, %c0_34] : memref<8x1xf32, #tpu.memory_space<vmem>>, vector<8x1xf32>
        tpu.vector_store %arg7[%c0_33, %c0_34], %44 {strides = array<i32>} : memref<8x1xf32, #tpu.memory_space<vmem>>, vector<8x1xf32>,
        %c0_35 = arith.constant 0 : index
        %c0_36 = arith.constant 0 : index
        %49 = vector.load %arg8[%c0_35, %c0_36] : memref<8x1xf32, #tpu.memory_space<vmem>>, vector<8x1xf32>
        tpu.vector_store %arg8[%c0_35, %c0_36], %47 {strides = array<i32>} : memref<8x1xf32, #tpu.memory_space<vmem>>, vector<8x1xf32>,
      } else {
      }
    } else {
    }
    %c1_i32 = arith.constant 1 : i32
    %3 = arith.cmpi eq, %arg0, %c1_i32 : i32
    %4 = arith.extui %3 : i1 to i32
    %c0_i32_1 = arith.constant 0 : i32
    %5 = arith.cmpi ne, %4, %c0_i32_1 : i32
    scf.if %5 {
      %6 = arith.index_cast %arg1 : i32 to index
      %c0 = arith.constant 0 : index
      %c0_2 = arith.constant 0 : index
      %7 = vector.load %arg9[%6, %c0, %c0_2] : memref<1x8x128xf32, #tpu.memory_space<vmem>>, vector<1x8x128xf32>
      %8 = vector.shape_cast %7 : vector<1x8x128xf32> to vector<8x128xf32>
      %c0_3 = arith.constant 0 : index
      %c0_4 = arith.constant 0 : index
      %9 = vector.load %arg7[%c0_3, %c0_4] : memref<8x1xf32, #tpu.memory_space<vmem>>, vector<8x1xf32>
      %10 = vector.broadcast %9 : vector<8x1xf32> to vector<8x128xf32>
      %11 = arith.mulf %8, %10 : vector<8x128xf32>
      %c0_5 = arith.constant 0 : index
      %c0_6 = arith.constant 0 : index
      %12 = vector.load %arg8[%c0_5, %c0_6] : memref<8x1xf32, #tpu.memory_space<vmem>>, vector<8x1xf32>
      %13 = vector.broadcast %12 : vector<8x1xf32> to vector<8x128xf32>
      %14 = arith.addf %11, %13 : vector<8x128xf32>
      %c0_7 = arith.constant 0 : index
      %c0_8 = arith.constant 0 : index
      %15 = vector.load %arg6[%c0_7, %c0_8] : memref<8x128xf32, #tpu.memory_space<vmem>>, vector<8x128xf32>
      tpu.vector_store %arg6[%c0_7, %c0_8], %14 {strides = array<i32>} : memref<8x128xf32, #tpu.memory_space<vmem>>, vector<8x128xf32>,
    } else {
    }
    return
  }
  func.func @transform_0(%arg0: i32, %arg1: i32) -> (i32, i32) {
    %c1_i32 = arith.constant 1 : i32
    %0 = arith.subi %c1_i32, %arg0 : i32
    %1 = arith.muli %arg1, %0 : i32
    %c0_i32 = arith.constant 0 : i32
    %c0_i32_0 = arith.constant 0 : i32
    return %c0_i32, %1 : i32, i32
  }
  func.func @transform_1(%arg0: i32, %arg1: i32) -> (i32, i32) {
    %c0_i32 = arith.constant 0 : i32
    %c0_i32_0 = arith.constant 0 : i32
    %c0_i32_1 = arith.constant 0 : i32
    return %c0_i32, %c0_i32_0 : i32, i32
  }
  func.func @transform_2(%arg0: i32, %arg1: i32) -> (i32, i32) {
    %c0_i32 = arith.constant 0 : i32
    %c0_i32_0 = arith.constant 0 : i32
    %c0_i32_1 = arith.constant 0 : i32
    return %c0_i32, %c0_i32_0 : i32, i32
  }
  func.func @transform_3(%arg0: i32, %arg1: i32) -> (i32, i32) {
    %c0_i32 = arith.constant 0 : i32
    %c0_i32_0 = arith.constant 0 : i32
    %c0_i32_1 = arith.constant 0 : i32
    return %c0_i32, %c0_i32_0 : i32, i32
  }
  func.func @transform_4(%arg0: i32, %arg1: i32) -> (i32, i32) {
    %0 = arith.muli %arg1, %arg0 : i32
    %c0_i32 = arith.constant 0 : i32
    %c0_i32_0 = arith.constant 0 : i32
    return %c0_i32, %0 : i32, i32
  }
}

</mosaic_0001>

<llo_original>
// kernel: downsample_d.1
$region0: #{downsample_d.1}
  #allocation0 [shape = 'u32[]', space=smem, size = 0x4, offset = 0x4, fixed_abs, tag = 'smem constant byte address 0x4 - core index']
  #allocation1 [shape = 'u32[144,128]{1,0:T(1,128)}', space=vmem, size = 0x12000, scoped, tag = 'internal scratch']
  #allocation2 [shape = 'f32[8,1]{1,0:T(8,128)}', space=vmem, size = 0x1000, scoped, tag = 'scratch operand']
  #allocation3 [shape = 'f32[8,1]{1,0:T(8,128)}', space=vmem, size = 0x1000, scoped, tag = 'scratch operand']
  #allocation4 [shape = 'f32[1,8,128]{2,1,0:T(8,128)}', space=vmem, size = 0x1000, scoped, tag = 'scratch operand']
  %s0 = inlined_call_operand.vmem [shape: f32[16,128], index: 0, kind: input, shape index: {}]
  %s1 = inlined_call_operand.vmem [shape: f32[8,16], index: 1, kind: input, shape index: {}]
  %s2 = inlined_call_operand.vmem [shape: f32[8,1], index: 2, kind: input, shape index: {}]
  %s3 = inlined_call_operand.vmem [shape: f32[8,1], index: 3, kind: input, shape index: {}]
  %s4 = inlined_call_operand.vmem [shape: f32[8,128], index: 4, kind: output, shape index: {}]
  %s5 = sld [smem:[#allocation0]]
  $region65: #{downsample_d.1} parent=0
    _
  %s7 = ssub.s32 1, %s5
  %s8 = scalar_select 0, %s7, %s5
  loop: start=0, step=1, limit=4
  $region2: #{downsample_d.1} parent=0 // loop_pre_header
    _
  $region3: #{downsample_d.1} parent=0 // loop_header
    %s10 = sphi 0, %s14
    %p11 = scmp.ge.s32.totalorder %s10, 4
    %s17 = sphi 0, %s29
    %s18 = sphi 0, %s25
    %s19 = sphi 0, %s17
    %s20 = sphi 0, %s18
    %s21 = sphi 0, %s19
    %s22 = sphi 0, %s20
    %s36 = sphi 0, %s38
    %s39 = sphi 0, %s36
    %s40 = sphi 0, %s39
    %s56 = sphi 0, %s40
    %s60 = sphi 0, %s60
    %s62 = sphi 0, %s60
    %s63 = sphi 0, %s62
    %s77 = sphi 0, %s63
    %s81 = sphi 0, %s81
    %s83 = sphi 0, %s81
    %s84 = sphi 0, %s83
    %s98 = sphi 0, %s84
    %s102 = sphi 0, %s102
    %s104 = sphi 0, %s102
    %s105 = sphi 0, %s104
    %s119 = sphi 0, %s105
    %s127 = sphi 0, %s129
    %s130 = sphi 0, %s127
    %s131 = sphi 0, %s130
    %s147 = sphi 0, %s131
  $region4: #{downsample_d.1} parent=0 // loop_header_branch
    %13 = sbr.rel (%p11) target = $region8
  $region5: #{downsample_d.1} parent=0 // loop_body
    %s15 = ssub.s32 %s10, 1
    %s16 = ssub.s32 %s10, 2
    %s23 = sadd.s32 1, %s18
    %p24 = scmp.ge.s32.totalorder %s23, 1
    %s25 = scalar_select %p24, 0, %s23
    %s26 = sadd.s32 1, %s17
    %s27 = scalar_select %p24, %s26, %s17
    %p28 = scmp.ge.s32.totalorder %s27, 2
    %s29 = scalar_select %p28, 0, %s27
    %s30 = ssub.s32 1, %s17
    %s31 = smul.u32 %s18, %s30
    %s32 = ssub.s32 1, %s29
    %s33 = smul.u32 %s25, %s32
    %s34 = ssub.s32 %s31, %s33
    %p35 = scmp.eq.s32.totalorder %s34, 0
    %s37 = sadd.s32 %s36, 1
    %s38 = scalar_select %p35, %s36, %s37
    %p41 = pneg %p35
    %p42 = scmp.eq.s32.totalorder %s10, 1
    %p43 = por %p41, %p42
    %p44 = scmp.ne.s32.totalorder %s36, %s39
    %p45 = scmp.eq.s32.totalorder %s10, 0
    %p46 = por %p44, %p45
    %p47 = scmp.ne.s32.totalorder %s36, %s39
    %p48 = scmp.eq.s32.totalorder %s15, 1
    %p49 = por %p47, %p48
    %p50 = scmp.ne.s32.totalorder %s39, %s40
    %p51 = scmp.eq.s32.totalorder %s15, 0
    %p52 = por %p50, %p51
    %p53 = scmp.ne.s32.totalorder %s39, %s40
    %p54 = scmp.eq.s32.totalorder %s16, 1
    %p55 = por %p53, %p54
    %p57 = scmp.ne.s32.totalorder %s40, %s56
    %p58 = scmp.eq.s32.totalorder %s16, 0
    %p59 = por %p57, %p58
    %s61 = sadd.s32 %s60, 1
    %p64 = scmp.eq.s32.totalorder %s10, 1
    %p65 = scmp.ne.s32.totalorder %s60, %s62
    %p66 = scmp.eq.s32.totalorder %s10, 0
    %p67 = por %p65, %p66
    %p68 = scmp.ne.s32.totalorder %s60, %s62
    %p69 = scmp.eq.s32.totalorder %s15, 1
    %p70 = por %p68, %p69
    %p71 = scmp.ne.s32.totalorder %s62, %s63
    %p72 = scmp.eq.s32.totalorder %s15, 0
    %p73 = por %p71, %p72
    %p74 = scmp.ne.s32.totalorder %s62, %s63
    %p75 = scmp.eq.s32.totalorder %s16, 1
    %p76 = por %p74, %p75
    %p78 = scmp.ne.s32.totalorder %s63, %s77
    %p79 = scmp.eq.s32.totalorder %s16, 0
    %p80 = por %p78, %p79
    %s82 = sadd.s32 %s81, 1
    %p85 = scmp.eq.s32.totalorder %s10, 1
    %p86 = scmp.ne.s32.totalorder %s81, %s83
    %p87 = scmp.eq.s32.totalorder %s10, 0
    %p88 = por %p86, %p87
    %p89 = scmp.ne.s32.totalorder %s81, %s83
    %p90 = scmp.eq.s32.totalorder %s15, 1
    %p91 = por %p89, %p90
    %p92 = scmp.ne.s32.totalorder %s83, %s84
    %p93 = scmp.eq.s32.totalorder %s15, 0
    %p94 = por %p92, %p93
    %p95 = scmp.ne.s32.totalorder %s83, %s84
    %p96 = scmp.eq.s32.totalorder %s16, 1
    %p97 = por %p95, %p96
    %p99 = scmp.ne.s32.totalorder %s84, %s98
    %p100 = scmp.eq.s32.totalorder %s16, 0
    %p101 = por %p99, %p100
    %s103 = sadd.s32 %s102, 1
    %p106 = scmp.eq.s32.totalorder %s10, 1
    %p107 = scmp.ne.s32.totalorder %s102, %s104
    %p108 = scmp.eq.s32.totalorder %s10, 0
    %p109 = por %p107, %p108
    %p110 = scmp.ne.s32.totalorder %s102, %s104
    %p111 = scmp.eq.s32.totalorder %s15, 1
    %p112 = por %p110, %p111
    %p113 = scmp.ne.s32.totalorder %s104, %s105
    %p114 = scmp.eq.s32.totalorder %s15, 0
    %p115 = por %p113, %p114
    %p116 = scmp.ne.s32.totalorder %s104, %s105
    %p117 = scmp.eq.s32.totalorder %s16, 1
    %p118 = por %p116, %p117
    %p120 = scmp.ne.s32.totalorder %s105, %s119
    %p121 = scmp.eq.s32.totalorder %s16, 0
    %p122 = por %p120, %p121
    %s123 = smul.u32 %s18, %s17
    %s124 = smul.u32 %s25, %s29
    %s125 = ssub.s32 %s123, %s124
    %p126 = scmp.eq.s32.totalorder %s125, 0
    %s128 = sadd.s32 %s127, 1
    %s129 = scalar_select %p126, %s127, %s128
    %p132 = pneg %p126
    %p133 = scmp.eq.s32.totalorder %s10, 1
    %p134 = por %p132, %p133
    %p135 = scmp.ne.s32.totalorder %s127, %s130
    %p136 = scmp.eq.s32.totalorder %s10, 0
    %p137 = por %p135, %p136
    %p138 = scmp.ne.s32.totalorder %s127, %s130
    %p139 = scmp.eq.s32.totalorder %s15, 1
    %p140 = por %p138, %p139
    %p141 = scmp.ne.s32.totalorder %s130, %s131
    %p142 = scmp.eq.s32.totalorder %s15, 0
    %p143 = por %p141, %p142
    %p144 = scmp.ne.s32.totalorder %s130, %s131
    %p145 = scmp.eq.s32.totalorder %s16, 1
    %p146 = por %p144, %p145
    %p148 = scmp.ne.s32.totalorder %s131, %s147
    %p149 = scmp.eq.s32.totalorder %s16, 0
    %p150 = por %p148, %p149
    %p151 = scmp.le.s32.totalorder 1, %s10
    %p152 = scmp.lt.s32.totalorder %s10, 3
    %p153 = pnand %p151, %p152
    %p154 = pneg %p153
    // Predicated region
    $region9: #{downsample_d.1} parent=5 // pred_check
      _
    $region10: #{downsample_d.1} parent=5 // pred_check_branch
      %156 = sbr.rel (%p153) target = $region12
    $region11: #{downsample_d.1} parent=5 // pred_region
      %s157 = ssub.s32 %s10, 1
      // Predicated region
      $region13: #{downsample_d.1} parent=11 // pred_check
        %p158 = pneg %p73
      $region14: #{downsample_d.1} parent=11 // pred_check_branch
        %160 = sbr.rel (%p158) target = $region16
      $region15: #{downsample_d.1} parent=11 // pred_region
        _
      $region16: #{downsample_d.1} parent=11 // pred_fallthru
        _
      // Predicated region
      $region17: #{downsample_d.1} parent=11 // pred_check
        %p161 = pneg %p94
      $region18: #{downsample_d.1} parent=11 // pred_check_branch
        %163 = sbr.rel (%p161) target = $region20
      $region19: #{downsample_d.1} parent=11 // pred_region
        _
      $region20: #{downsample_d.1} parent=11 // pred_fallthru
        _
      // Predicated region
      $region21: #{downsample_d.1} parent=11 // pred_check
        %p164 = pneg %p115
      $region22: #{downsample_d.1} parent=11 // pred_check_branch
        %166 = sbr.rel (%p164) target = $region24
      $region23: #{downsample_d.1} parent=11 // pred_region
        _
      $region24: #{downsample_d.1} parent=11 // pred_fallthru
        _
    $region12: #{downsample_d.1} parent=5 // pred_fallthru
      _
    %p167 = scmp.lt.s32.totalorder %s10, 2
    // Predicated region
    $region25: #{downsample_d.1} parent=5 // pred_check
      %p168 = pneg %p167
    $region26: #{downsample_d.1} parent=5 // pred_check_branch
      %170 = sbr.rel (%p168) target = $region28
    $region27: #{downsample_d.1} parent=5 // pred_region
      // Predicated region
      $region29: #{downsample_d.1} parent=27 // pred_check
        %p171 = pneg %p46
      $region30: #{downsample_d.1} parent=27 // pred_check_branch
        %173 = sbr.rel (%p171) target = $region32
      $region31: #{downsample_d.1} parent=27 // pred_region
        %s174 = ssub.s32 1, %s17
        %s175 = smul.u32 %s18, %s174
        %p176 = scmp.lt.s32.totalorder %s175, 0
        %s177 = scalar_select %p176, %s175, 0
        %s178 = smul.addr %s177, 8
        %s179 = scalar_lea.vmem %s0, %s178
        %s180 = ssub.s32 1, %s17
        %s181 = smul.u32 %s18, %s180
      $region32: #{downsample_d.1} parent=27 // pred_fallthru
        _
    $region28: #{downsample_d.1} parent=5 // pred_fallthru
      _
    %p182 = scmp.le.s32.totalorder 1, %s10
    %p183 = scmp.lt.s32.totalorder %s10, 3
    %p184 = pnand %p182, %p183
    %p185 = pneg %p184
    // Predicated region
    $region33: #{downsample_d.1} parent=5 // pred_check
      _
    $region34: #{downsample_d.1} parent=5 // pred_check_branch
      %187 = sbr.rel (%p184) target = $region36
    $region35: #{downsample_d.1} parent=5 // pred_region
      %s188 = ssub.s32 %s10, 1
      %s189 = ssub.s32 1, %s19
      %s190 = smul.u32 %s20, %s189
      %p191 = scmp.lt.s32.totalorder %s190, 0
      %s192 = scalar_select %p191, %s190, 0
      %s193 = smul.addr %s192, 8
      %s194 = scalar_lea.vmem %s0, %s193
      %p195 = pneg %p52
      %p196 = pneg %p49
      %p197 = pneg %p73
      %p198 = pneg %p70
      %p199 = pneg %p94
      %p200 = pneg %p91
      %p201 = pneg %p115
      %p202 = pneg %p112
      %p203 = pneg %p143
      %p204 = pneg %p140
      %s205 = smul.u32 %s20, %s19
      %p206 = scmp.lt.s32.totalorder %s205, 0
      %s207 = scalar_select %p206, %s205, 0
      %s208 = smul.addr %s207, 8
      %s209 = scalar_lea.vmem %s4, %s208
      %s210 = ssub.s32 1, %s19
      %s211 = smul.u32 %s20, %s210
      %p212 = scmp.lt.s32.totalorder %s211, 0
      %s213 = scalar_select %p212, %s211, 0
      %s214 = smul.addr %s213, 8
      %s215 = scalar_lea.vmem %s0, %s214
      %s216 = ssub.s32 1, %s19
      %s217 = smul.u32 %s20, %s216
      %s218 = smul.u32 %s20, %s19
      %p219 = scmp.lt.s32.totalorder %s218, 0
      %s220 = scalar_select %p219, %s218, 0
      %s221 = smul.addr %s220, 8
      %s222 = scalar_lea.vmem %s4, %s221
      %s223 = smul.u32 %s20, %s19
      %p224 = scmp.eq.s32.totalorder %s19, 0
      // Predicated region
      $region37: #{downsample_d.1} parent=35 // pred_check
        %p225 = pneg %p224
      $region38: #{downsample_d.1} parent=35 // pred_check_branch
        %227 = sbr.rel (%p225) target = $region40
      $region39: #{downsample_d.1} parent=35 // pred_region
        %p228 = scmp.eq.s32.totalorder %s20, 0
        // Predicated region
        $region41: #{downsample_d.1} parent=39 // pred_check
          %p229 = pneg %p228
        $region42: #{downsample_d.1} parent=39 // pred_check_branch
          %231 = sbr.rel (%p229) target = $region44
        $region43: #{downsample_d.1} parent=39 // pred_region
          %vm232 = vcmask 7168
          %233 = vst.msk [vmem:[#allocation2] sm:$0xff] %vm232, 0.0
          %234 = vst.msk [vmem:[#allocation3] sm:$0xff] %vm232, 0.0
        $region44: #{downsample_d.1} parent=39 // pred_fallthru
          _
        %v235 = vld [vmem:[%s1] sm:$0xff]
        %v236 = vld [vmem:[%s215] sm:$0xff]
        %v237 = vld [vmem:[%s215 + $0x8] sm:$0xff]
        %vm238 = vcmask 130048
        %v240 = vsel %vm238, %v235, 0
        %242 = vmatprep.subr.mxu0 0.0
        %243 = vmatpush1.msra.mxu0 %v236
        %244 = vmatprep.subr.mxu0 0.0
        %245 = vmatpush1.msra.mxu0 %v237
        %246 = vmatprep.subr.mxu0 0.0
        %247 = vmatpush1.msra.mxu0 0.0
        %248 = vmatprep.subr.mxu0 0.0
        %249 = vmatpush1.msra.mxu0 0.0
        %250 = vmatprep.subr.mxu0 0.0
        %251 = vmatpush1.msra.mxu0 0.0
        %252 = vmatprep.subr.mxu0 0.0
        %253 = vmatpush1.msra.mxu0 0.0
        %254 = vmatprep.subr.mxu0 0.0
        %255 = vmatpush1.msra.mxu0 0.0
        %256 = vmatprep.subr.mxu0 0.0
        %257 = vmatpush1.msra.mxu0 0.0
        %258 = vmatprep.subr.mxu0 0.0
        %259 = vmatpush1.msra.mxu0 0.0
        %260 = vmatprep.subr.mxu0 0.0
        %261 = vmatpush1.msra.mxu0 0.0
        %262 = vmatprep.subr.mxu0 0.0
        %263 = vmatpush1.msra.mxu0 0.0
        %264 = vmatprep.subr.mxu0 0.0
        %265 = vmatpush1.msra.mxu0 0.0
        %266 = vmatprep.subr.mxu0 0.0
        %267 = vmatpush1.msra.mxu0 0.0
        %268 = vmatprep.subr.mxu0 0.0
        %269 = vmatpush1.msra.mxu0 0.0
        %270 = vmatprep.subr.mxu0 0.0
        %271 = vmatpush1.msra.mxu0 0.0
        %272 = vmatprep.subr.mxu0 0.0
        %273 = vmatpush1.msra.mxu0 0.0
        %274 = vmatprep.subr.mxu0 0.0
        %275 = vmatpush1.msra.mxu0 0.0
        %276 = vmatprep.subr.mxu0 0.0
        %277 = vmatpush1.msra.mxu0 0.0
        %278 = vmatprep.subr.mxu0 0.0
        %279 = vmatpush1.msra.mxu0 0.0
        %280 = vmatprep.subr.mxu0 0.0
        %281 = vmatpush1.msra.mxu0 0.0
        %282 = vmatprep.subr.mxu0 0.0
        %283 = vmatpush1.msra.mxu0 0.0
        %284 = vmatprep.subr.mxu0 0.0
        %285 = vmatpush1.msra.mxu0 0.0
        %286 = vmatprep.subr.mxu0 0.0
        %287 = vmatpush1.msra.mxu0 0.0
        %288 = vmatprep.subr.mxu0 0.0
        %289 = vmatpush1.msra.mxu0 0.0
        %290 = vmatprep.subr.mxu0 0.0
        %291 = vmatpush1.msra.mxu0 0.0
        %292 = vmatprep.subr.mxu0 0.0
        %293 = vmatpush1.msra.mxu0 0.0
        %294 = vmatprep.subr.mxu0 0.0
        %295 = vmatpush1.msra.mxu0 0.0
        %296 = vmatprep.subr.mxu0 0.0
        %297 = vmatpush1.msra.mxu0 0.0
        %298 = vmatprep.subr.mxu0 0.0
        %299 = vmatpush1.msra.mxu0 0.0
        %300 = vmatprep.subr.mxu0 0.0
        %301 = vmatpush1.msra.mxu0 0.0
        %302 = vmatprep.subr.mxu0 0.0
        %303 = vmatpush1.msra.mxu0 0.0
        %304 = vmatprep.subr.mxu0 0.0
        %305 = vmatpush1.msra.mxu0 0.0
        %306 = vmatprep.mubr.f32.mxu0 0.0
        %307 = vmatmul.mubr.f32.gmra.mrb[0].mxu0 %v240
        %v308 = vpop.f32.mrb[0].mxu0
        %v309 = vadd.f32 0.0, %v308
        %v310 = vpop.f32.mrb[0].mxu0
        %311 = vdwg.mxu0
        %s312 = smul.u32 %s20, 8
        %s313 = scalar_lea.vmem [#allocation4], %s312
        %314 = vst [vmem:[%s313] sm:$0xff] %v309
        %v315 = vld [vmem:[#allocation2] sm:$0xff]
        %316 = vadd.xlane.f32.xlu0 %v309
        %v317 = vpop.xlane.xlu0 %316
        %v318 = vadd.f32 %v315, %v317
        %vm319 = vcmask 7168
        %320 = vst.msk [vmem:[#allocation2] sm:$0xff] %vm319, %v318
        %v321 = vld [vmem:[#allocation3] sm:$0xff]
        %v322 = vmul.f32 %v309, %v309
        %323 = vadd.xlane.f32.xlu0 %v322
        %v324 = vpop.xlane.xlu0 %323
        %v325 = vadd.f32 %v321, %v324
        %326 = vst.msk [vmem:[#allocation3] sm:$0xff] %vm319, %v325
        // Predicated region
        $region45: #{downsample_d.1} parent=39 // pred_check
          %p327 = pneg %p228
        $region46: #{downsample_d.1} parent=39 // pred_check_branch
          %329 = sbr.rel (%p327) target = $region48
        $region47: #{downsample_d.1} parent=39 // pred_region
          %v330 = vld [vmem:[#allocation2] sm:$0xff]
          %v331 = vmul.f32 %v330, 0.0078125
          %v332 = vld [vmem:[#allocation3] sm:$0xff]
          %v333 = vmul.f32 %v332, 0.0078125
          %v334 = vmul.f32 %v331, %v331
          %v335 = vsub.f32 %v333, %v334
          %v336 = vmax.f32 %v335, 0.0
          %v337 = vadd.f32 %v336, 1e-05
          %v338 = vrsqrt.pop %v337
          %v339 = vld [vmem:[%s2] sm:$0xff]
          %v340 = vmul.f32 %v339, %v338
          %v341 = vld [vmem:[%s3] sm:$0xff]
          %v342 = vmul.f32 %v331, %v340
          %v343 = vsub.f32 %v341, %v342
          %344 = vst.msk [vmem:[#allocation2] sm:$0xff] %vm319, %v340
          %345 = vst.msk [vmem:[#allocation3] sm:$0xff] %vm319, %v343
        $region48: #{downsample_d.1} parent=39 // pred_fallthru
          _
      $region40: #{downsample_d.1} parent=35 // pred_fallthru
        _
      %p346 = scmp.eq.s32.totalorder %s19, 1
      // Predicated region
      $region49: #{downsample_d.1} parent=35 // pred_check
        %p347 = pneg %p346
      $region50: #{downsample_d.1} parent=35 // pred_check_branch
        %349 = sbr.rel (%p347) target = $region52
      $region51: #{downsample_d.1} parent=35 // pred_region
        %s350 = smul.u32 %s20, 8
        %s351 = scalar_lea.vmem [#allocation4], %s350
        %v352 = vld [vmem:[%s351] sm:$0xff]
        %v353 = vld [vmem:[#allocation2] sm:$0xff]
        %355 = vset.pattern.permute.xlu0 0
        %356 = vperm.xlu0 %355, %v353
        %v357 = vpop.permute.xlu0 %356
        %v359 = vmul.f32 %v352, %v357
        %v360 = vld [vmem:[#allocation3] sm:$0xff]
        %362 = vset.pattern.permute.xlu0 0
        %363 = vperm.xlu0 %362, %v360
        %v364 = vpop.permute.xlu0 %363
        %v366 = vadd.f32 %v359, %v364
        %367 = vst [vmem:[%s222] sm:$0xff] %v366
      $region52: #{downsample_d.1} parent=35 // pred_fallthru
        _
      %s368 = smul.u32 %s20, %s19
      %p369 = scmp.lt.s32.totalorder %s368, 0
      %s370 = scalar_select %p369, %s368, 0
      %s371 = smul.addr %s370, 8
      %s372 = scalar_lea.vmem %s4, %s371
      // Predicated region
      $region53: #{downsample_d.1} parent=35 // pred_check
        %p373 = pneg %p140
      $region54: #{downsample_d.1} parent=35 // pred_check_branch
        %375 = sbr.rel (%p373) target = $region56
      $region55: #{downsample_d.1} parent=35 // pred_region
        %s376 = smul.u32 %s20, %s19
      $region56: #{downsample_d.1} parent=35 // pred_fallthru
        _
    $region36: #{downsample_d.1} parent=5 // pred_fallthru
      _
    %p377 = scmp.le.s32.totalorder 2, %s10
    // Predicated region
    $region57: #{downsample_d.1} parent=5 // pred_check
      %p378 = pneg %p377
    $region58: #{downsample_d.1} parent=5 // pred_check_branch
      %380 = sbr.rel (%p378) target = $region60
    $region59: #{downsample_d.1} parent=5 // pred_region
      %s381 = ssub.s32 %s10, 2
      // Predicated region
      $region61: #{downsample_d.1} parent=59 // pred_check
        %p382 = pneg %p146
      $region62: #{downsample_d.1} parent=59 // pred_check_branch
        %384 = sbr.rel (%p382) target = $region64
      $region63: #{downsample_d.1} parent=59 // pred_region
        %s385 = smul.u32 %s22, %s21
        %p386 = scmp.lt.s32.totalorder %s385, 0
        %s387 = scalar_select %p386, %s385, 0
        %s388 = smul.addr %s387, 8
        %s389 = scalar_lea.vmem %s4, %s388
      $region64: #{downsample_d.1} parent=59 // pred_fallthru
        _
    $region60: #{downsample_d.1} parent=5 // pred_fallthru
      _
  $region6: #{downsample_d.1} parent=0 // loop_footer
    %s14 = sadd.s32 1, %s10
  $region7: #{downsample_d.1} parent=0 // loop_footer_branch
    %9 = sbr.rel target = $region3
  $region8: #{downsample_d.1} parent=0 // loop_exit
    _

</llo_original>
